<compile_context>
chip_gen: v6e
topology: v6e:2x2x1
jax: 0.10.0
libtpu: 0.0.40
codegen_flags: <defaults>
</compile_context>

<pallas_src>
import jax
import jax.numpy as jnp
from jax.experimental import pallas as pl
from jax.experimental.pallas import tpu as pltpu

BN_EPS = 1e-5


def _make_encoder_kernel(layer_dims, act_flags, w_row_offs, b_offs, has_mxu):
    """Fused MLP kernel, channels-first.

    Ref order: kpts_ref [1,2,TILE_N], scores_ref [1,1,TILE_N], w0 [C1,3] f32,
               (w_slab [R,Cmax] bf16 if has_mxu), b_slab [S,1] f32,
               out_ref [1,feature_dim,TILE_N].
    """
    num_layers = len(layer_dims)

    def kernel(kpts_ref, scores_ref, w0_ref, *rest):
        if has_mxu:
            w_slab_ref, b_slab_ref, out_ref = rest
        else:
            b_slab_ref, out_ref = rest

        # ---- layer 0 (C_in = 3): VPU broadcast FMAs, skip the MXU ----
        c1 = layer_dims[0][1]
        w0 = w0_ref[...].astype(jnp.float32)                     # (C1, 3)
        b0 = b_slab_ref[b_offs[0]:b_offs[0] + c1, :]             # (C1, 1) f32
        kt = kpts_ref[0].astype(jnp.float32)                     # (2, TILE_N)
        sc = scores_ref[0].astype(jnp.float32)                   # (1, TILE_N)
        h = (w0[:, 0:1] * kt[0:1, :]
             + w0[:, 1:2] * kt[1:2, :]
             + w0[:, 2:3] * sc) + b0                             # (C1, TILE_N) f32
        if act_flags[0]:
            # bf16 carry: the next dot consumes bf16 anyway; halves VMEM/vreg footprint.
            h = jnp.maximum(h, 0.0).astype(jnp.bfloat16)

        # ---- remaining layers: bf16 MXU matmul, f32 accumulate, f32 elementwise ----
        for li in range(1, num_layers):
            c_in, c_out = layer_dims[li]
            r = w_row_offs[li - 1]
            w = w_slab_ref[r:r + c_out, 0:c_in]                  # (C_out, C_in) bf16
            b = b_slab_ref[b_offs[li]:b_offs[li] + c_out, :]     # (C_out, 1) f32
            h = jnp.dot(w, h, preferred_element_type=jnp.float32) + b
            if act_flags[li]:
                h = jnp.maximum(h, 0.0).astype(jnp.bfloat16)

        out_ref[0] = h.astype(out_ref.dtype)                     # lane-dense store

    return kernel


def _pick_tile_n(n, b, tile_n_max):
    """Lane tile: as large as possible (multiple of 128), but keep >= 2 grid steps."""
    if n <= 128:
        return n
    tile = min(tile_n_max, n)
    tile = max(128, (tile // 128) * 128)
    # v7x megacore: if B * n_tiles == 1 one TensorCore would idle -> split N in two.
    if b * (-(-n // tile)) < 2:
        half = -(-n // 2)
        tile = max(128, -(-half // 128) * 128)
    return tile


def keypoint_encoder_forward(kpts, scores, packed, *, tile_n_max=2048,
                             out_dtype=jnp.float32, kpts_channels_first=False):
    """kpts: [B, N, 2] (or [B, 2, N] if kpts_channels_first), scores: [B, N].

    Returns [B, feature_dim, N] (PyTorch NCL layout)."""
    if kpts_channels_first:
        kpts_t = kpts.astype(jnp.float32)                        # [B, 2, N]
    else:
        kpts_t = jnp.transpose(kpts, (0, 2, 1)).astype(jnp.float32)
    B, _, N = kpts_t.shape
    scores_r = scores[:, None, :].astype(jnp.float32)            # [B, 1, N]

    layer_dims = packed["layer_dims"]
    act_flags = packed["act_flags"]
    feature_dim = layer_dims[-1][1]
    has_mxu = len(layer_dims) > 1

    tile_n = _pick_tile_n(N, B, tile_n_max)
    n_tiles = pl.cdiv(N, tile_n)

    inputs = [kpts_t, scores_r, packed["w0"]]
    in_specs = [
        pl.BlockSpec((1, 2, tile_n), lambda b, t: (b, 0, t)),
        pl.BlockSpec((1, 1, tile_n), lambda b, t: (b, 0, t)),
        pl.BlockSpec(packed["w0"].shape, lambda b, t: (0, 0)),
    ]
    if has_mxu:
        inputs.append(packed["w_slab"])
        in_specs.append(pl.BlockSpec(packed["w_slab"].shape, lambda b, t: (0, 0)))
    inputs.append(packed["b_slab"])
    in_specs.append(pl.BlockSpec(packed["b_slab"].shape, lambda b, t: (0, 0)))

    kernel = _make_encoder_kernel(layer_dims, act_flags,
                                  packed["w_row_offs"], packed["b_offs"], has_mxu)

    return pl.pallas_call(
        kernel,
        out_shape=jax.ShapeDtypeStruct((B, feature_dim, N), out_dtype),
        grid_spec=pltpu.PrefetchScalarGridSpec(
            num_scalar_prefetch=0,
            grid=(B, n_tiles),
            in_specs=in_specs,
            out_specs=pl.BlockSpec((1, feature_dim, tile_n),
                                   lambda b, t: (b, 0, t)),
        ),
        compiler_params=pltpu.CompilerParams(
            # Both axes independent -> megacore sharding on v7x.
            dimension_semantics=("parallel", "parallel"),
            # Headroom so large TILE_N also fits under v5e's 16 MiB default scoped VMEM.
            vmem_limit_bytes=32 * 1024 * 1024),
    )(*inputs)


def init_params(key, feature_dim, layers):
    """Synthetic parameters; BN (eval mode, default running stats) + bias folded."""
    channels = [3] + list(layers) + [feature_dim]
    n = len(channels)
    weights, biases, act_flags = [], [], []
    for i in range(1, n):
        c_in, c_out = channels[i - 1], channels[i]
        key, kw, kb, kg, kbeta = jax.random.split(key, 5)
        w = 0.1 * jax.random.normal(kw, (c_out, c_in), jnp.float32)
        if i == n - 1:
            b = jnp.zeros((c_out,), jnp.float32)       # nn.init.constant_(bias, 0.0)
        else:
            b = 0.1 * jax.random.normal(kb, (c_out,), jnp.float32)
        is_hidden = i < n - 1
        if is_hidden:
            gamma = 1.0 + 0.05 * jax.random.normal(kg, (c_out,), jnp.float32)
            beta = 0.05 * jax.random.normal(kbeta, (c_out,), jnp.float32)
            running_mean = jnp.zeros((c_out,), jnp.float32)
            running_var = jnp.ones((c_out,), jnp.float32)
            scale = gamma / jnp.sqrt(running_var + BN_EPS)
            shift = beta - running_mean * scale
            w = w * scale[:, None]
            b = scale * b + shift
        w_dtype = jnp.float32 if i == 1 else jnp.bfloat16
        weights.append(w.astype(w_dtype))
        biases.append(b.reshape(c_out, 1).astype(jnp.float32))
        act_flags.append(is_hidden)
    return {"weights": weights, "biases": biases, "act_flags": tuple(act_flags)}


def pack_params(params):
    """One-time packing: all biases -> one f32 slab, MXU weights -> one bf16 slab."""
    weights, biases = params["weights"], params["biases"]
    num_layers = len(weights)
    layer_dims = tuple((int(w.shape[1]), int(w.shape[0])) for w in weights)

    def pad_to(c, m):
        return -(-c // m) * m

    # Biases: (sum_C_padded, 1) f32, each segment 8-row aligned.
    b_offs, parts, off = [], [], 0
    for b in biases:
        c = int(b.shape[0])
        cp = pad_to(c, 8)
        parts.append(jnp.pad(jnp.reshape(b.astype(jnp.float32), (c, 1)),
                             ((0, cp - c), (0, 0))))
        b_offs.append(off)
        off += cp
    b_slab = jnp.concatenate(parts, axis=0)

    # MXU-layer weights: one bf16 slab, rows 16-aligned (bf16 sublane packing).
    w_row_offs, wparts, roff = [], [], 0
    w_slab = None
    if num_layers > 1:
        c_in_max = max(int(w.shape[1]) for w in weights[1:])
        for w in weights[1:]:
            co, ci = int(w.shape[0]), int(w.shape[1])
            cop = pad_to(co, 16)
            wparts.append(jnp.pad(w.astype(jnp.bfloat16),
                                  ((0, cop - co), (0, c_in_max - ci))))
            w_row_offs.append(roff)
            roff += cop
        w_slab = jnp.concatenate(wparts, axis=0)

    return {
        "w0": weights[0].astype(jnp.float32),
        "w_slab": w_slab,
        "b_slab": b_slab,
        "w_row_offs": tuple(w_row_offs),
        "b_offs": tuple(b_offs),
        "layer_dims": layer_dims,
        "act_flags": params["act_flags"],
    }


def reference_forward(kpts, scores, params):
    """Plain-JAX mirror of the fused kernel math (same folded params, bf16 dots)."""
    x = jnp.concatenate(
        [jnp.transpose(kpts, (0, 2, 1)), scores[:, None, :]], axis=1
    ).astype(jnp.float32)                                            # [B, 3, N]
    h = x
    for li in range(len(params["weights"])):
        w = params["weights"][li]
        b = params["biases"][li]
        if li == 0:
            h = jnp.einsum("oc,bcn->bon", w.astype(jnp.float32), h,
                           preferred_element_type=jnp.float32) + b[None]
        else:
            h = jnp.einsum("oc,bcn->bon", w, h.astype(w.dtype),
                           preferred_element_type=jnp.float32) + b[None]
        if params["act_flags"][li]:
            h = jnp.maximum(h, 0.0)
    return h


if __name__ == "__main__":
    key = jax.random.PRNGKey(0)
    feature_dim = 32
    layers = [16, 32]
    k1, k2, k3, k4, k5 = jax.random.split(key, 5)

    params = init_params(k3, feature_dim, layers)
    packed = pack_params(params)

    # Case 1: B=2, N=256 -> one 256-lane tile per batch, two parallel grid steps.
    B, N = 2, 256
    kpts = jax.random.uniform(k1, (B, N, 2), jnp.float32)           # [B, N, 2]
    scores = jax.random.uniform(k2, (B, N), jnp.float32)            # [B, N]
    out = jax.block_until_ready(keypoint_encoder_forward(kpts, scores, packed))
    ref = reference_forward(kpts, scores, params)
    assert out.shape == (B, feature_dim, N), out.shape
    assert jnp.allclose(out, ref, atol=1e-2, rtol=1e-2), "mismatch vs reference (case 1)"

    # Case 2: B=1, N=512 -> exercises the >=2-grid-step split (v7x megacore) path.
    B2, N2 = 1, 512
    kpts2 = jax.random.uniform(k4, (B2, N2, 2), jnp.float32)
    scores2 = jax.random.uniform(k5, (B2, N2), jnp.float32)
    out2 = jax.block_until_ready(keypoint_encoder_forward(kpts2, scores2, packed))
    ref2 = reference_forward(kpts2, scores2, params)
    assert out2.shape == (B2, feature_dim, N2), out2.shape
    assert jnp.allclose(out2, ref2, atol=1e-2, rtol=1e-2), "mismatch vs reference (case 2)"

    print("KERNEL_OK")
</pallas_src>

<mosaic_0001>
module attributes {stable_mosaic.version = 11 : i64} {
  func.func @kernel(%arg0: i32, %arg1: i32, %arg2: memref<1x2x256xf32, #tpu.memory_space<vmem>>, %arg3: memref<1x1x256xf32, #tpu.memory_space<vmem>>, %arg4: memref<16x3xf32, #tpu.memory_space<vmem>>, %arg5: memref<64x32xbf16, #tpu.memory_space<vmem>>, %arg6: memref<80x1xf32, #tpu.memory_space<vmem>>, %arg7: memref<1x32x256xf32, #tpu.memory_space<vmem>>) attributes {dimension_semantics = [#tpu.dimension_semantics<parallel>, #tpu.dimension_semantics<parallel>], iteration_bounds = array<i64: 2, 1>, scalar_prefetch = 0 : i64, scratch_operands = 0 : i64, tpu.core_type = #tpu.core_type<tc>, window_params = [{transform_indices = @transform_0, window_bounds = array<i64: 1, 2, 256>}, {transform_indices = @transform_1, window_bounds = array<i64: 1, 1, 256>}, {pipeline_mode = #tpu.pipeline_mode<synchronous>, transform_indices = @transform_2, window_bounds = array<i64: 16, 3>}, {pipeline_mode = #tpu.pipeline_mode<synchronous>, transform_indices = @transform_3, window_bounds = array<i64: 64, 32>}, {pipeline_mode = #tpu.pipeline_mode<synchronous>, transform_indices = @transform_4, window_bounds = array<i64: 80, 1>}, {transform_indices = @transform_5, window_bounds = array<i64: 1, 32, 256>}]} {
    %c0 = arith.constant 0 : index
    %c0_0 = arith.constant 0 : index
    %0 = vector.load %arg4[%c0, %c0_0] : memref<16x3xf32, #tpu.memory_space<vmem>>, vector<16x3xf32>
    %c0_1 = arith.constant 0 : index
    %c0_2 = arith.constant 0 : index
    %1 = vector.load %arg6[%c0_1, %c0_2] : memref<80x1xf32, #tpu.memory_space<vmem>>, vector<16x1xf32>
    %c0_3 = arith.constant 0 : index
    %c0_4 = arith.constant 0 : index
    %c0_5 = arith.constant 0 : index
    %2 = vector.load %arg2[%c0_3, %c0_4, %c0_5] : memref<1x2x256xf32, #tpu.memory_space<vmem>>, vector<1x2x256xf32>
    %3 = vector.shape_cast %2 : vector<1x2x256xf32> to vector<2x256xf32>
    %c0_6 = arith.constant 0 : index
    %c0_7 = arith.constant 0 : index
    %c0_8 = arith.constant 0 : index
    %4 = vector.load %arg3[%c0_6, %c0_7, %c0_8] : memref<1x1x256xf32, #tpu.memory_space<vmem>>, vector<1x1x256xf32>
    %5 = vector.shape_cast %4 : vector<1x1x256xf32> to vector<1x256xf32>
    %6 = vector.extract_strided_slice %0 {offsets = [0, 0], sizes = [16, 1], strides = [1, 1]} : vector<16x3xf32> to vector<16x1xf32>
    %7 = vector.extract_strided_slice %3 {offsets = [0, 0], sizes = [1, 256], strides = [1, 1]} : vector<2x256xf32> to vector<1x256xf32>
    %8 = vector.broadcast %6 : vector<16x1xf32> to vector<16x256xf32>
    %9 = vector.broadcast %7 : vector<1x256xf32> to vector<16x256xf32>
    %10 = arith.mulf %8, %9 : vector<16x256xf32>
    %11 = vector.extract_strided_slice %0 {offsets = [0, 1], sizes = [16, 1], strides = [1, 1]} : vector<16x3xf32> to vector<16x1xf32>
    %12 = vector.extract_strided_slice %3 {offsets = [1, 0], sizes = [1, 256], strides = [1, 1]} : vector<2x256xf32> to vector<1x256xf32>
    %13 = vector.broadcast %11 : vector<16x1xf32> to vector<16x256xf32>
    %14 = vector.broadcast %12 : vector<1x256xf32> to vector<16x256xf32>
    %15 = arith.mulf %13, %14 : vector<16x256xf32>
    %16 = arith.addf %10, %15 : vector<16x256xf32>
    %17 = vector.extract_strided_slice %0 {offsets = [0, 2], sizes = [16, 1], strides = [1, 1]} : vector<16x3xf32> to vector<16x1xf32>
    %18 = vector.broadcast %17 : vector<16x1xf32> to vector<16x256xf32>
    %19 = vector.broadcast %5 : vector<1x256xf32> to vector<16x256xf32>
    %20 = arith.mulf %18, %19 : vector<16x256xf32>
    %21 = arith.addf %16, %20 : vector<16x256xf32>
    %22 = vector.broadcast %1 : vector<16x1xf32> to vector<16x256xf32>
    %23 = arith.addf %21, %22 : vector<16x256xf32>
    %cst = arith.constant 0.000000e+00 : f32
    %24 = vector.broadcast %cst : f32 to vector<16x256xf32>
    %25 = arith.maximumf %23, %24 : vector<16x256xf32>
    %26 = arith.truncf %25 : vector<16x256xf32> to vector<16x256xbf16>
    %c0_9 = arith.constant 0 : index
    %c0_10 = arith.constant 0 : index
    %27 = vector.load %arg5[%c0_9, %c0_10] : memref<64x32xbf16, #tpu.memory_space<vmem>>, vector<32x16xbf16>
    %c16 = arith.constant 16 : index
    %c0_11 = arith.constant 0 : index
    %28 = vector.load %arg6[%c16, %c0_11] : memref<80x1xf32, #tpu.memory_space<vmem>>, vector<32x1xf32>
    %cst_12 = arith.constant dense<0.000000e+00> : vector<32x256xf32>
    %29 = tpu.matmul %27, %26, %cst_12 {dimension_numbers = #tpu.dot_dimension_numbers<[1], [0], [0], [1], [0, 0, 1, 1], [], []>} : vector<32x16xbf16>, vector<16x256xbf16>, vector<32x256xf32> -> vector<32x256xf32>
    %30 = vector.broadcast %28 : vector<32x1xf32> to vector<32x256xf32>
    %31 = arith.addf %29, %30 : vector<32x256xf32>
    %cst_13 = arith.constant 0.000000e+00 : f32
    %32 = vector.broadcast %cst_13 : f32 to vector<32x256xf32>
    %33 = arith.maximumf %31, %32 : vector<32x256xf32>
    %34 = arith.truncf %33 : vector<32x256xf32> to vector<32x256xbf16>
    %c32 = arith.constant 32 : index
    %c0_14 = arith.constant 0 : index
    %35 = vector.load %arg5[%c32, %c0_14] : memref<64x32xbf16, #tpu.memory_space<vmem>>, vector<32x32xbf16>
    %c48 = arith.constant 48 : index
    %c0_15 = arith.constant 0 : index
    %36 = vector.load %arg6[%c48, %c0_15] : memref<80x1xf32, #tpu.memory_space<vmem>>, vector<32x1xf32>
    %cst_16 = arith.constant dense<0.000000e+00> : vector<32x256xf32>
    %37 = tpu.matmul %35, %34, %cst_16 {dimension_numbers = #tpu.dot_dimension_numbers<[1], [0], [0], [1], [0, 0, 1, 1], [], []>} : vector<32x32xbf16>, vector<32x256xbf16>, vector<32x256xf32> -> vector<32x256xf32>
    %38 = vector.broadcast %36 : vector<32x1xf32> to vector<32x256xf32>
    %39 = arith.addf %37, %38 : vector<32x256xf32>
    %c0_17 = arith.constant 0 : index
    %c0_18 = arith.constant 0 : index
    %c0_19 = arith.constant 0 : index
    %40 = vector.load %arg7[%c0_17, %c0_18, %c0_19] : memref<1x32x256xf32, #tpu.memory_space<vmem>>, vector<1x32x256xf32>
    %41 = vector.shape_cast %40 : vector<1x32x256xf32> to vector<32x256xf32>
    %42 = vector.shape_cast %39 : vector<32x256xf32> to vector<1x32x256xf32>
    tpu.vector_store %arg7[%c0_17, %c0_18, %c0_19], %42 {strides = array<i32>} : memref<1x32x256xf32, #tpu.memory_space<vmem>>, vector<1x32x256xf32>,
    return
  }
  func.func @transform_0(%arg0: i32, %arg1: i32) -> (i32, i32, i32) {
    %c0_i32 = arith.constant 0 : i32
    %c0_i32_0 = arith.constant 0 : i32
    return %arg0, %c0_i32, %arg1 : i32, i32, i32
  }
  func.func @transform_1(%arg0: i32, %arg1: i32) -> (i32, i32, i32) {
    %c0_i32 = arith.constant 0 : i32
    %c0_i32_0 = arith.constant 0 : i32
    return %arg0, %c0_i32, %arg1 : i32, i32, i32
  }
  func.func @transform_2(%arg0: i32, %arg1: i32) -> (i32, i32) {
    %c0_i32 = arith.constant 0 : i32
    %c0_i32_0 = arith.constant 0 : i32
    %c0_i32_1 = arith.constant 0 : i32
    return %c0_i32, %c0_i32_0 : i32, i32
  }
  func.func @transform_3(%arg0: i32, %arg1: i32) -> (i32, i32) {
    %c0_i32 = arith.constant 0 : i32
    %c0_i32_0 = arith.constant 0 : i32
    %c0_i32_1 = arith.constant 0 : i32
    return %c0_i32, %c0_i32_0 : i32, i32
  }
  func.func @transform_4(%arg0: i32, %arg1: i32) -> (i32, i32) {
    %c0_i32 = arith.constant 0 : i32
    %c0_i32_0 = arith.constant 0 : i32
    %c0_i32_1 = arith.constant 0 : i32
    return %c0_i32, %c0_i32_0 : i32, i32
  }
  func.func @transform_5(%arg0: i32, %arg1: i32) -> (i32, i32, i32) {
    %c0_i32 = arith.constant 0 : i32
    %c0_i32_0 = arith.constant 0 : i32
    return %arg0, %c0_i32, %arg1 : i32, i32, i32
  }
}

</mosaic_0001>

<llo_original>
// kernel: tpu_custom_call.1
$region0: #{tpu_custom_call.1}
  #allocation0 [shape = 'u32[]', space=smem, size = 0x4, offset = 0x4, fixed_abs, tag = 'smem constant byte address 0x4 - core index']
  #allocation1 [shape = 'u32[144,128]{1,0:T(1,128)}', space=vmem, size = 0x12000, scoped, tag = 'internal scratch']
  %s0 = inlined_call_operand.vmem [shape: f32[2,2,256], index: 0, kind: input, shape index: {}]
  %s1 = inlined_call_operand.vmem [shape: f32[2,1,256], index: 1, kind: input, shape index: {}]
  %s2 = inlined_call_operand.vmem [shape: f32[16,3], index: 2, kind: input, shape index: {}]
  %s3 = inlined_call_operand.vmem [shape: bf16[64,32], index: 3, kind: input, shape index: {}]
  %s4 = inlined_call_operand.vmem [shape: f32[80,1], index: 4, kind: input, shape index: {}]
  %s5 = inlined_call_operand.hbm [shape: f32[2,32,256], index: 5, kind: output, shape index: {}]
  %s6 = sld [smem:[#allocation0]]
  $region53: #{tpu_custom_call.1} parent=0
    _
  %s8 = ssub.s32 1, %s6
  %s9 = scalar_select 0, %s8, %s6
  $region1: #{tpu_custom_call.1} parent=0
    #allocation2 [shape = 'u8[65536]{0}', space=vmem, size = 0x10000, scoped, tag = 'output window, operand 0']
    #allocation3 [shape = 's32[2]{0}', space=sflag, size = 0x8, scoped, tag = 'scoped memory for tpu_custom_call.1']
    %10 = vsyncpa [#allocation3], 0
    %s11 = scalar_lea.sflag [#allocation3], 1
    %12 = vsyncpa %s11, 0
    loop: start=0, step=1, limit=4
    $region2: #{tpu_custom_call.1} parent=1 // loop_pre_header
      _
    $region3: #{tpu_custom_call.1} parent=1 // loop_header
      %s14 = sphi 0, %s18
      %p15 = scmp.ge.s32.totalorder %s14, 4
      %s21 = sphi 0, %s33
      %s22 = sphi 0, %s29
      %s23 = sphi 0, %s21
      %s24 = sphi 0, %s22
      %s25 = sphi 0, %s23
      %s26 = sphi 0, %s24
      %s38 = sphi 0, %s40
      %s41 = sphi 0, %s38
      %s42 = sphi 0, %s41
      %s58 = sphi 0, %s42
      %s66 = sphi 0, %s68
      %s69 = sphi 0, %s66
      %s70 = sphi 0, %s69
      %s86 = sphi 0, %s70
      %s90 = sphi 0, %s90
      %s92 = sphi 0, %s90
      %s93 = sphi 0, %s92
      %s107 = sphi 0, %s93
      %s111 = sphi 0, %s111
      %s113 = sphi 0, %s111
      %s114 = sphi 0, %s113
      %s128 = sphi 0, %s114
      %s132 = sphi 0, %s132
      %s134 = sphi 0, %s132
      %s135 = sphi 0, %s134
      %s149 = sphi 0, %s135
      %s157 = sphi 0, %s159
      %s160 = sphi 0, %s157
      %s161 = sphi 0, %s160
      %s177 = sphi 0, %s161
    $region4: #{tpu_custom_call.1} parent=1 // loop_header_branch
      %17 = sbr.rel (%p15) target = $region8
    $region5: #{tpu_custom_call.1} parent=1 // loop_body
      %s19 = ssub.s32 %s14, 1
      %s20 = ssub.s32 %s14, 2
      %s27 = sadd.s32 1, %s22
      %p28 = scmp.ge.s32.totalorder %s27, 1
      %s29 = scalar_select %p28, 0, %s27
      %s30 = sadd.s32 1, %s21
      %s31 = scalar_select %p28, %s30, %s21
      %p32 = scmp.ge.s32.totalorder %s31, 2
      %s33 = scalar_select %p32, 0, %s31
      %s34 = ssub.s32 %s21, %s33
      %s35 = ssub.s32 %s22, %s29
      %s36 = sor.u32 %s34, %s35
      %p37 = scmp.eq.s32.totalorder %s36, 0
      %s39 = sadd.s32 %s38, 1
      %s40 = scalar_select %p37, %s38, %s39
      %p43 = pneg %p37
      %p44 = scmp.eq.s32.totalorder %s14, 1
      %p45 = por %p43, %p44
      %p46 = scmp.ne.s32.totalorder %s38, %s41
      %p47 = scmp.eq.s32.totalorder %s14, 0
      %p48 = por %p46, %p47
      %p49 = scmp.ne.s32.totalorder %s38, %s41
      %p50 = scmp.eq.s32.totalorder %s19, 1
      %p51 = por %p49, %p50
      %p52 = scmp.ne.s32.totalorder %s41, %s42
      %p53 = scmp.eq.s32.totalorder %s19, 0
      %p54 = por %p52, %p53
      %p55 = scmp.ne.s32.totalorder %s41, %s42
      %p56 = scmp.eq.s32.totalorder %s20, 1
      %p57 = por %p55, %p56
      %p59 = scmp.ne.s32.totalorder %s42, %s58
      %p60 = scmp.eq.s32.totalorder %s20, 0
      %p61 = por %p59, %p60
      %s62 = ssub.s32 %s21, %s33
      %s63 = ssub.s32 %s22, %s29
      %s64 = sor.u32 %s62, %s63
      %p65 = scmp.eq.s32.totalorder %s64, 0
      %s67 = sadd.s32 %s66, 1
      %s68 = scalar_select %p65, %s66, %s67
      %p71 = pneg %p65
      %p72 = scmp.eq.s32.totalorder %s14, 1
      %p73 = por %p71, %p72
      %p74 = scmp.ne.s32.totalorder %s66, %s69
      %p75 = scmp.eq.s32.totalorder %s14, 0
      %p76 = por %p74, %p75
      %p77 = scmp.ne.s32.totalorder %s66, %s69
      %p78 = scmp.eq.s32.totalorder %s19, 1
      %p79 = por %p77, %p78
      %p80 = scmp.ne.s32.totalorder %s69, %s70
      %p81 = scmp.eq.s32.totalorder %s19, 0
      %p82 = por %p80, %p81
      %p83 = scmp.ne.s32.totalorder %s69, %s70
      %p84 = scmp.eq.s32.totalorder %s20, 1
      %p85 = por %p83, %p84
      %p87 = scmp.ne.s32.totalorder %s70, %s86
      %p88 = scmp.eq.s32.totalorder %s20, 0
      %p89 = por %p87, %p88
      %s91 = sadd.s32 %s90, 1
      %p94 = scmp.eq.s32.totalorder %s14, 1
      %p95 = scmp.ne.s32.totalorder %s90, %s92
      %p96 = scmp.eq.s32.totalorder %s14, 0
      %p97 = por %p95, %p96
      %p98 = scmp.ne.s32.totalorder %s90, %s92
      %p99 = scmp.eq.s32.totalorder %s19, 1
      %p100 = por %p98, %p99
      %p101 = scmp.ne.s32.totalorder %s92, %s93
      %p102 = scmp.eq.s32.totalorder %s19, 0
      %p103 = por %p101, %p102
      %p104 = scmp.ne.s32.totalorder %s92, %s93
      %p105 = scmp.eq.s32.totalorder %s20, 1
      %p106 = por %p104, %p105
      %p108 = scmp.ne.s32.totalorder %s93, %s107
      %p109 = scmp.eq.s32.totalorder %s20, 0
      %p110 = por %p108, %p109
      %s112 = sadd.s32 %s111, 1
      %p115 = scmp.eq.s32.totalorder %s14, 1
      %p116 = scmp.ne.s32.totalorder %s111, %s113
      %p117 = scmp.eq.s32.totalorder %s14, 0
      %p118 = por %p116, %p117
      %p119 = scmp.ne.s32.totalorder %s111, %s113
      %p120 = scmp.eq.s32.totalorder %s19, 1
      %p121 = por %p119, %p120
      %p122 = scmp.ne.s32.totalorder %s113, %s114
      %p123 = scmp.eq.s32.totalorder %s19, 0
      %p124 = por %p122, %p123
      %p125 = scmp.ne.s32.totalorder %s113, %s114
      %p126 = scmp.eq.s32.totalorder %s20, 1
      %p127 = por %p125, %p126
      %p129 = scmp.ne.s32.totalorder %s114, %s128
      %p130 = scmp.eq.s32.totalorder %s20, 0
      %p131 = por %p129, %p130
      %s133 = sadd.s32 %s132, 1
      %p136 = scmp.eq.s32.totalorder %s14, 1
      %p137 = scmp.ne.s32.totalorder %s132, %s134
      %p138 = scmp.eq.s32.totalorder %s14, 0
      %p139 = por %p137, %p138
      %p140 = scmp.ne.s32.totalorder %s132, %s134
      %p141 = scmp.eq.s32.totalorder %s19, 1
      %p142 = por %p140, %p141
      %p143 = scmp.ne.s32.totalorder %s134, %s135
      %p144 = scmp.eq.s32.totalorder %s19, 0
      %p145 = por %p143, %p144
      %p146 = scmp.ne.s32.totalorder %s134, %s135
      %p147 = scmp.eq.s32.totalorder %s20, 1
      %p148 = por %p146, %p147
      %p150 = scmp.ne.s32.totalorder %s135, %s149
      %p151 = scmp.eq.s32.totalorder %s20, 0
      %p152 = por %p150, %p151
      %s153 = ssub.s32 %s21, %s33
      %s154 = ssub.s32 %s22, %s29
      %s155 = sor.u32 %s153, %s154
      %p156 = scmp.eq.s32.totalorder %s155, 0
      %s158 = sadd.s32 %s157, 1
      %s159 = scalar_select %p156, %s157, %s158
      %p162 = pneg %p156
      %p163 = scmp.eq.s32.totalorder %s14, 1
      %p164 = por %p162, %p163
      %p165 = scmp.ne.s32.totalorder %s157, %s160
      %p166 = scmp.eq.s32.totalorder %s14, 0
      %p167 = por %p165, %p166
      %p168 = scmp.ne.s32.totalorder %s157, %s160
      %p169 = scmp.eq.s32.totalorder %s19, 1
      %p170 = por %p168, %p169
      %p171 = scmp.ne.s32.totalorder %s160, %s161
      %p172 = scmp.eq.s32.totalorder %s19, 0
      %p173 = por %p171, %p172
      %p174 = scmp.ne.s32.totalorder %s160, %s161
      %p175 = scmp.eq.s32.totalorder %s20, 1
      %p176 = por %p174, %p175
      %p178 = scmp.ne.s32.totalorder %s161, %s177
      %p179 = scmp.eq.s32.totalorder %s20, 0
      %p180 = por %p178, %p179
      %p181 = scmp.le.s32.totalorder 1, %s14
      %p182 = scmp.lt.s32.totalorder %s14, 3
      %p183 = pnand %p181, %p182
      %p184 = pneg %p183
      // Predicated region
      $region9: #{tpu_custom_call.1} parent=5 // pred_check
        _
      $region10: #{tpu_custom_call.1} parent=5 // pred_check_branch
        %186 = sbr.rel (%p183) target = $region12
      $region11: #{tpu_custom_call.1} parent=5 // pred_region
        %s187 = ssub.s32 %s14, 1
        // Predicated region
        $region13: #{tpu_custom_call.1} parent=11 // pred_check
          %p188 = pneg %p103
        $region14: #{tpu_custom_call.1} parent=11 // pred_check_branch
          %190 = sbr.rel (%p188) target = $region16
        $region15: #{tpu_custom_call.1} parent=11 // pred_region
          _
        $region16: #{tpu_custom_call.1} parent=11 // pred_fallthru
          _
        // Predicated region
        $region17: #{tpu_custom_call.1} parent=11 // pred_check
          %p191 = pneg %p124
        $region18: #{tpu_custom_call.1} parent=11 // pred_check_branch
          %193 = sbr.rel (%p191) target = $region20
        $region19: #{tpu_custom_call.1} parent=11 // pred_region
          _
        $region20: #{tpu_custom_call.1} parent=11 // pred_fallthru
          _
        // Predicated region
        $region21: #{tpu_custom_call.1} parent=11 // pred_check
          %p194 = pneg %p145
        $region22: #{tpu_custom_call.1} parent=11 // pred_check_branch
          %196 = sbr.rel (%p194) target = $region24
        $region23: #{tpu_custom_call.1} parent=11 // pred_region
          _
        $region24: #{tpu_custom_call.1} parent=11 // pred_fallthru
          _
      $region12: #{tpu_custom_call.1} parent=5 // pred_fallthru
        _
      %p197 = scmp.lt.s32.totalorder %s14, 2
      // Predicated region
      $region25: #{tpu_custom_call.1} parent=5 // pred_check
        %p198 = pneg %p197
      $region26: #{tpu_custom_call.1} parent=5 // pred_check_branch
        %200 = sbr.rel (%p198) target = $region28
      $region27: #{tpu_custom_call.1} parent=5 // pred_region
        // Predicated region
        $region29: #{tpu_custom_call.1} parent=27 // pred_check
          %p201 = pneg %p48
        $region30: #{tpu_custom_call.1} parent=27 // pred_check_branch
          %203 = sbr.rel (%p201) target = $region32
        $region31: #{tpu_custom_call.1} parent=27 // pred_region
          %s204 = smul.u32 2, %s22
          %p205 = scmp.lt.s32.totalorder %s21, 1
          %s206 = scalar_select %p205, %s21, 1
          %p207 = scmp.lt.s32.totalorder %s204, 1
          %s208 = scalar_select %p207, %s204, 1
          %s209 = smul.addr %s206, 2
          %s210 = sadd.s32 %s208, %s209
          %s211 = smul.addr %s210, 2
          %s212 = scalar_lea.vmem %s0, %s211
          %s213 = smul.u32 2, %s22
        $region32: #{tpu_custom_call.1} parent=27 // pred_fallthru
          _
        // Predicated region
        $region33: #{tpu_custom_call.1} parent=27 // pred_check
          %p214 = pneg %p76
        $region34: #{tpu_custom_call.1} parent=27 // pred_check_branch
          %216 = sbr.rel (%p214) target = $region36
        $region35: #{tpu_custom_call.1} parent=27 // pred_region
          %s217 = smul.u32 2, %s22
          %p218 = scmp.lt.s32.totalorder %s21, 1
          %s219 = scalar_select %p218, %s21, 1
          %p220 = scmp.lt.s32.totalorder %s217, 1
          %s221 = scalar_select %p220, %s217, 1
          %s222 = smul.addr %s219, 2
          %s223 = sadd.s32 %s221, %s222
          %s224 = scalar_lea.vmem %s1, %s223
          %s225 = smul.u32 2, %s22
        $region36: #{tpu_custom_call.1} parent=27 // pred_fallthru
          _
      $region28: #{tpu_custom_call.1} parent=5 // pred_fallthru
        _
      %p226 = scmp.le.s32.totalorder 1, %s14
      %p227 = scmp.lt.s32.totalorder %s14, 3
      %p228 = pnand %p226, %p227
      %p229 = pneg %p228
      // Predicated region
      $region37: #{tpu_custom_call.1} parent=5 // pred_check
        _
      $region38: #{tpu_custom_call.1} parent=5 // pred_check_branch
        %231 = sbr.rel (%p228) target = $region40
      $region39: #{tpu_custom_call.1} parent=5 // pred_region
        %s232 = ssub.s32 %s14, 1
        %s233 = smul.u32 2, %s24
        %p234 = scmp.lt.s32.totalorder %s23, 1
        %s235 = scalar_select %p234, %s23, 1
        %p236 = scmp.lt.s32.totalorder %s233, 1
        %s237 = scalar_select %p236, %s233, 1
        %s238 = smul.addr %s235, 2
        %s239 = sadd.s32 %s237, %s238
        %s240 = smul.addr %s239, 2
        %s241 = scalar_lea.vmem %s0, %s240
        %p242 = pneg %p54
        %p243 = pneg %p51
        %s244 = smul.u32 2, %s24
        %p245 = scmp.lt.s32.totalorder %s23, 1
        %s246 = scalar_select %p245, %s23, 1
        %p247 = scmp.lt.s32.totalorder %s244, 1
        %s248 = scalar_select %p247, %s244, 1
        %s249 = smul.addr %s246, 2
        %s250 = sadd.s32 %s248, %s249
        %s251 = scalar_lea.vmem %s1, %s250
        %p252 = pneg %p82
        %p253 = pneg %p79
        %p254 = pneg %p103
        %p255 = pneg %p100
        %p256 = pneg %p124
        %p257 = pneg %p121
        %p258 = pneg %p145
        %p259 = pneg %p142
        %p260 = pneg %p173
        %p261 = pneg %p170
        %s262 = sand.u32 %s160, 1
        %s263 = scalar_lea.sflag [#allocation3], %s262
        %s264 = sand.u32 %s160, 1
        %s265 = smul.addr %s264, 64
        %s266 = scalar_lea.vmem [#allocation2], %s265
        %s267 = smul.u32 2, %s24
        %p268 = scmp.lt.s32.totalorder %s23, 1
        %s269 = scalar_select %p268, %s23, 1
        %p270 = scmp.lt.s32.totalorder %s267, 1
        %s271 = scalar_select %p270, %s267, 1
        %s272 = smul.addr %s269, 2
        %s273 = sadd.s32 %s271, %s272
        %s274 = smul.addr %s273, 2
        %s275 = scalar_lea.vmem %s0, %s274
        %s276 = smul.u32 2, %s24
        %s277 = smul.u32 2, %s24
        %p278 = scmp.lt.s32.totalorder %s23, 1
        %s279 = scalar_select %p278, %s23, 1
        %p280 = scmp.lt.s32.totalorder %s277, 1
        %s281 = scalar_select %p280, %s277, 1
        %s282 = smul.addr %s279, 2
        %s283 = sadd.s32 %s281, %s282
        %s284 = scalar_lea.vmem %s1, %s283
        %s285 = smul.u32 2, %s24
        %s286 = smul.u32 2, %s24
        %v288 = vld [vmem:[%s2] sm:$0xff]
        %v289 = vld [vmem:[%s2 + $0x8] sm:$0xff]
        %v290 = vld [vmem:[%s4] sm:$0xff]
        %v291 = vld [vmem:[%s4 + $0x8] sm:$0xff]
        %v292 = vld [vmem:[%s275] sm:$0xf]
        %v293 = vld [vmem:[%s284] sm:$0x3]
        %295 = vset.pattern.permute.xlu0 0
        %296 = vperm.xlu0 %295, %v288
        %v297 = vpop.permute.xlu0 %296
        %300 = vset.pattern.permute.xlu0 0
        %301 = vperm.xlu0 %300, %v289
        %v302 = vpop.permute.xlu0 %301
        %v305 = vlaneseq
        %v306 = vshrl.u32 %v305, 7
        %v307 = vsub.s32 0, %v306
        %v308 = vrot.slane %v292, %v307
        %v309 = vlaneseq
        %v310 = vshrl.u32 %v309, 7
        %v311 = vsub.s32 2, %v310
        %v312 = vrot.slane %v292, %v311
        %v315 = vlaneseq
        %v316 = vshrl.u32 %v315, 7
        %v317 = vsub.s32 0, %v316
        %v318 = vrot.slane %v308, %v317
        %v319 = vlaneseq
        %v320 = vshrl.u32 %v319, 7
        %v321 = vsub.s32 0, %v320
        %v322 = vrot.slane %v312, %v321
        %v323 = vmul.f32 %v297, %v318
        %v324 = vmul.f32 %v297, %v322
        %v325 = vmul.f32 %v302, %v318
        %v326 = vmul.f32 %v302, %v322
        %327 = vset.pattern.permute.xlu0 1
        %328 = vperm.xlu0 %327, %v288
        %v329 = vpop.permute.xlu0 %328
        %331 = vset.pattern.permute.xlu0 1
        %332 = vperm.xlu0 %331, %v289
        %v333 = vpop.permute.xlu0 %332
        %v335 = vlaneseq
        %v336 = vshrl.u32 %v335, 7
        %v337 = vsub.s32 1, %v336
        %v338 = vrot.slane %v292, %v337
        %v339 = vlaneseq
        %v340 = vshrl.u32 %v339, 7
        %v341 = vsub.s32 3, %v340
        %v342 = vrot.slane %v292, %v341
        %v345 = vlaneseq
        %v346 = vshrl.u32 %v345, 7
        %v347 = vsub.s32 1, %v346
        %v348 = vrot.slane %v338, %v347
        %v349 = vlaneseq
        %v350 = vshrl.u32 %v349, 7
        %v351 = vsub.s32 1, %v350
        %v352 = vrot.slane %v342, %v351
        %v353 = vmul.f32 %v329, %v348
        %v354 = vmul.f32 %v329, %v352
        %v355 = vmul.f32 %v333, %v348
        %v356 = vmul.f32 %v333, %v352
        %v357 = vadd.f32 %v323, %v353
        %v358 = vadd.f32 %v324, %v354
        %v359 = vadd.f32 %v325, %v355
        %v360 = vadd.f32 %v326, %v356
        %361 = vset.pattern.permute.xlu0 2
        %362 = vperm.xlu0 %361, %v288
        %v363 = vpop.permute.xlu0 %362
        %365 = vset.pattern.permute.xlu0 2
        %366 = vperm.xlu0 %365, %v289
        %v367 = vpop.permute.xlu0 %366
        %v370 = vlaneseq
        %v371 = vshrl.u32 %v370, 7
        %v372 = vsub.s32 0, %v371
        %v373 = vrot.slane %v293, %v372
        %v374 = vlaneseq
        %v375 = vshrl.u32 %v374, 7
        %v376 = vsub.s32 1, %v375
        %v377 = vrot.slane %v293, %v376
        %v380 = vmul.f32 %v363, %v373
        %v381 = vmul.f32 %v363, %v377
        %v382 = vmul.f32 %v367, %v373
        %v383 = vmul.f32 %v367, %v377
        %v384 = vadd.f32 %v357, %v380
        %v385 = vadd.f32 %v358, %v381
        %v386 = vadd.f32 %v359, %v382
        %v387 = vadd.f32 %v360, %v383
        %389 = vset.pattern.permute.xlu0 0
        %390 = vperm.xlu0 %389, %v290
        %v391 = vpop.permute.xlu0 %390
        %394 = vset.pattern.permute.xlu0 0
        %395 = vperm.xlu0 %394, %v291
        %v396 = vpop.permute.xlu0 %395
        %v398 = vadd.f32 %v384, %v391
        %v399 = vadd.f32 %v385, %v391
        %v400 = vadd.f32 %v386, %v396
        %v401 = vadd.f32 %v387, %v396
        %v402 = vmax.f32 %v398, 0.0
        %v403 = vmax.f32 %v399, 0.0
        %v404 = vmax.f32 %v400, 0.0
        %v405 = vmax.f32 %v401, 0.0
        %v406 = vpack.c.bf16 %v404, %v402
        %v407 = vpack.c.bf16 %v405, %v403
        %v408 = vld [vmem:[%s3] sm:$0xf]
        %v409 = vld [vmem:[%s3 + $0x4] sm:$0xf]
        %v410 = vld [vmem:[%s3 + $0x8] sm:$0xf]
        %v411 = vld [vmem:[%s3 + $0xc] sm:$0xf]
        %v412 = vld [vmem:[%s4 + $0x10] sm:$0xff]
        %v413 = vld [vmem:[%s4 + $0x18] sm:$0xff]
        %v414 = vld [vmem:[%s4 + $0x20] sm:$0xff]
        %v415 = vld [vmem:[%s4 + $0x28] sm:$0xff]
        %417 = vset.pattern.permute.xlu0 0
        %418 = vperm.xlu0 %417, %v412
        %v419 = vpop.permute.xlu0 %418
        %422 = vset.pattern.permute.xlu0 0
        %423 = vperm.xlu0 %422, %v413
        %v424 = vpop.permute.xlu0 %423
        %427 = vset.pattern.permute.xlu0 0
        %428 = vperm.xlu0 %427, %v414
        %v429 = vpop.permute.xlu0 %428
        %432 = vset.pattern.permute.xlu0 0
        %433 = vperm.xlu0 %432, %v415
        %v434 = vpop.permute.xlu0 %433
        %v440 = vunpack.c.l.b16 %v408
        %v441 = vunpack.c.l.b16 %v409
        %v442 = vunpack.c.l.b16 %v410
        %v443 = vunpack.c.l.b16 %v411
        %v444 = vpack.c.b16 %v441, %v440
        %v445 = vpack.c.b16 %v443, %v442
        %vm446 = vcmask 130048
        %v448 = vsel %vm446, %v444, 0
        %v451 = vsel %vm446, %v445, 0
        %453 = vmatprep.subr.bf16.mxu0 0
        %454 = vmatpush1.bf16.msra.mxu0 0
        %455 = vmatprep.subr.bf16.mxu0 0
        %456 = vmatpush1.bf16.msra.mxu0 0
        %457 = vmatprep.subr.bf16.mxu0 0
        %458 = vmatpush1.bf16.msra.mxu0 0
        %459 = vmatprep.subr.bf16.mxu0 0
        %460 = vmatpush1.bf16.msra.mxu0 0
        %461 = vmatprep.subr.bf16.mxu0 0
        %462 = vmatpush1.bf16.msra.mxu0 0
        %463 = vmatprep.subr.bf16.mxu0 0
        %464 = vmatpush1.bf16.msra.mxu0 0
        %465 = vmatprep.subr.bf16.mxu0 0
        %466 = vmatpush1.bf16.msra.mxu0 0
        %467 = vmatprep.subr.bf16.mxu0 %v407
        %468 = vmatpush1.bf16.msra.mxu0 %v406
        %469 = vmatprep.subr.bf16.mxu0 0
        %470 = vmatpush2.bf16.msra.mxu0 0
        %471 = vmatprep.subr.bf16.mxu0 0
        %472 = vmatpush2.bf16.msra.mxu0 0
        %473 = vmatprep.subr.bf16.mxu0 0
        %474 = vmatpush2.bf16.msra.mxu0 0
        %475 = vmatprep.subr.bf16.mxu0 0
        %476 = vmatpush2.bf16.msra.mxu0 0
        %477 = vmatprep.subr.bf16.mxu0 0
        %478 = vmatpush2.bf16.msra.mxu0 0
        %479 = vmatprep.subr.bf16.mxu0 0
        %480 = vmatpush2.bf16.msra.mxu0 0
        %481 = vmatprep.subr.bf16.mxu0 0
        %482 = vmatpush2.bf16.msra.mxu0 0
        %483 = vmatprep.subr.bf16.mxu0 0
        %484 = vmatpush2.bf16.msra.mxu0 0
        %485 = vmatprep.mubr.bf16.mxu0 0
        %486 = vmatmul.mubr.bf16.gmra.mxu0 %v448
        %v487 = vpop.f32.mrf.mxu0
        %v488 = vadd.f32 %v419, %v487
        %v489 = vpop.f32.mrf.mxu0
        %v490 = vadd.f32 %v419, %v489
        %v491 = vpop.f32.mrf.mxu0
        %v492 = vadd.f32 %v424, %v491
        %v493 = vpop.f32.mrf.mxu0
        %v494 = vadd.f32 %v424, %v493
        %495 = vmatprep.mubr.bf16.mxu0 0
        %496 = vmatmul.mubr.bf16.gmra.mxu0 %v451
        %v497 = vpop.f32.mrf.mxu0
        %v498 = vadd.f32 %v429, %v497
        %v499 = vpop.f32.mrf.mxu0
        %v500 = vadd.f32 %v429, %v499
        %v501 = vpop.f32.mrf.mxu0
        %v502 = vadd.f32 %v434, %v501
        %v503 = vpop.f32.mrf.mxu0
        %v504 = vadd.f32 %v434, %v503
        %505 = vdwg.mxu0
        %v506 = vmax.f32 %v488, 0.0
        %v507 = vmax.f32 %v490, 0.0
        %v508 = vmax.f32 %v492, 0.0
        %v509 = vmax.f32 %v494, 0.0
        %v510 = vmax.f32 %v498, 0.0
        %v511 = vmax.f32 %v500, 0.0
        %v512 = vmax.f32 %v502, 0.0
        %v513 = vmax.f32 %v504, 0.0
        %v514 = vpack.c.bf16 %v508, %v506
        %v515 = vpack.c.bf16 %v509, %v507
        %v516 = vpack.c.bf16 %v512, %v510
        %v517 = vpack.c.bf16 %v513, %v511
        %v518 = vld [vmem:[%s3 + $0x10] sm:$0xf]
        %v519 = vld [vmem:[%s3 + $0x14] sm:$0xf]
        %v520 = vld [vmem:[%s3 + $0x18] sm:$0xf]
        %v521 = vld [vmem:[%s3 + $0x1c] sm:$0xf]
        %v522 = vld [vmem:[%s4 + $0x30] sm:$0xff]
        %v523 = vld [vmem:[%s4 + $0x38] sm:$0xff]
        %v524 = vld [vmem:[%s4 + $0x40] sm:$0xff]
        %v525 = vld [vmem:[%s4 + $0x48] sm:$0xff]
        %527 = vset.pattern.permute.xlu0 0
        %528 = vperm.xlu0 %527, %v522
        %v529 = vpop.permute.xlu0 %528
        %532 = vset.pattern.permute.xlu0 0
        %533 = vperm.xlu0 %532, %v523
        %v534 = vpop.permute.xlu0 %533
        %537 = vset.pattern.permute.xlu0 0
        %538 = vperm.xlu0 %537, %v524
        %v539 = vpop.permute.xlu0 %538
        %542 = vset.pattern.permute.xlu0 0
        %543 = vperm.xlu0 %542, %v525
        %v544 = vpop.permute.xlu0 %543
        %v550 = vunpack.c.l.b16 %v518
        %v551 = vunpack.c.l.b16 %v519
        %v552 = vunpack.c.l.b16 %v520
        %v553 = vunpack.c.l.b16 %v521
        %v554 = vpack.c.b16 %v551, %v550
        %v555 = vpack.c.b16 %v553, %v552
        %vm556 = vcmask 261120
        %v558 = vsel %vm556, %v554, 0
        %v561 = vsel %vm556, %v555, 0
        %563 = vmatprep.subr.bf16.mxu0 0
        %564 = vmatpush1.bf16.msra.mxu0 0
        %565 = vmatprep.subr.bf16.mxu0 0
        %566 = vmatpush1.bf16.msra.mxu0 0
        %567 = vmatprep.subr.bf16.mxu0 0
        %568 = vmatpush1.bf16.msra.mxu0 0
        %569 = vmatprep.subr.bf16.mxu0 0
        %570 = vmatpush1.bf16.msra.mxu0 0
        %571 = vmatprep.subr.bf16.mxu0 0
        %572 = vmatpush1.bf16.msra.mxu0 0
        %573 = vmatprep.subr.bf16.mxu0 0
        %574 = vmatpush1.bf16.msra.mxu0 0
        %575 = vmatprep.subr.bf16.mxu0 %v517
        %576 = vmatpush1.bf16.msra.mxu0 %v516
        %577 = vmatprep.subr.bf16.mxu0 %v515
        %578 = vmatpush1.bf16.msra.mxu0 %v514
        %579 = vmatprep.subr.bf16.mxu0 0
        %580 = vmatpush2.bf16.msra.mxu0 0
        %581 = vmatprep.subr.bf16.mxu0 0
        %582 = vmatpush2.bf16.msra.mxu0 0
        %583 = vmatprep.subr.bf16.mxu0 0
        %584 = vmatpush2.bf16.msra.mxu0 0
        %585 = vmatprep.subr.bf16.mxu0 0
        %586 = vmatpush2.bf16.msra.mxu0 0
        %587 = vmatprep.subr.bf16.mxu0 0
        %588 = vmatpush2.bf16.msra.mxu0 0
        %589 = vmatprep.subr.bf16.mxu0 0
        %590 = vmatpush2.bf16.msra.mxu0 0
        %591 = vmatprep.subr.bf16.mxu0 0
        %592 = vmatpush2.bf16.msra.mxu0 0
        %593 = vmatprep.subr.bf16.mxu0 0
        %594 = vmatpush2.bf16.msra.mxu0 0
        %595 = vmatprep.mubr.bf16.mxu0 0
        %596 = vmatmul.mubr.bf16.gmra.mxu0 %v558
        %v597 = vpop.f32.mrf.mxu0
        %v598 = vadd.f32 %v529, %v597
        %v599 = vpop.f32.mrf.mxu0
        %v600 = vadd.f32 %v529, %v599
        %v601 = vpop.f32.mrf.mxu0
        %v602 = vadd.f32 %v534, %v601
        %v603 = vpop.f32.mrf.mxu0
        %v604 = vadd.f32 %v534, %v603
        %605 = vmatprep.mubr.bf16.mxu0 0
        %606 = vmatmul.mubr.bf16.gmra.mxu0 %v561
        %v607 = vpop.f32.mrf.mxu0
        %v608 = vadd.f32 %v539, %v607
        %v609 = vpop.f32.mrf.mxu0
        %v610 = vadd.f32 %v539, %v609
        %v611 = vpop.f32.mrf.mxu0
        %v612 = vadd.f32 %v544, %v611
        %v613 = vpop.f32.mrf.mxu0
        %v614 = vadd.f32 %v544, %v613
        %615 = vdwg.mxu0
        %616 = vst [vmem:[%s266] sm:$0xff] %v598
        %617 = vst [vmem:[%s266 + $0x8] sm:$0xff] %v600
        %618 = vst [vmem:[%s266 + $0x10] sm:$0xff] %v602
        %619 = vst [vmem:[%s266 + $0x18] sm:$0xff] %v604
        %620 = vst [vmem:[%s266 + $0x20] sm:$0xff] %v608
        %621 = vst [vmem:[%s266 + $0x28] sm:$0xff] %v610
        %622 = vst [vmem:[%s266 + $0x30] sm:$0xff] %v612
        %623 = vst [vmem:[%s266 + $0x38] sm:$0xff] %v614
        %s624 = sand.u32 %s160, 1
        %s625 = scalar_lea.sflag [#allocation3], %s624
        %s626 = sand.u32 %s160, 1
        %s627 = smul.addr %s626, 64
        %s628 = scalar_lea.vmem [#allocation2], %s627
        // Predicated region
        $region41: #{tpu_custom_call.1} parent=39 // pred_check
          %p629 = pneg %p170
        $region42: #{tpu_custom_call.1} parent=39 // pred_check_branch
          %631 = sbr.rel (%p629) target = $region44
        $region43: #{tpu_custom_call.1} parent=39 // pred_region
          %s632 = smul.u32 2, %s24
          %s634 = ssub.s32 1024, 1024
          %635 = vsyncadd %s625, %s634
          %s636 = smul.addr %s23, 8
          %s637 = sadd.s32 %s632, %s636
          %s638 = smul.addr %s637, 128
          %s639 = scalar_lea.hbm %s5, %s638
          %s640 = sshll.u32 %s628, 4
          %s641 = int_to_ptr.vmem [resolvable:$true] %s640
          %646 = dma.vmem_to_hbm [thread:$0]  %s641, 1024, %s639, %s625, 256, 256, 16
        $region44: #{tpu_custom_call.1} parent=39 // pred_fallthru
          _
      $region40: #{tpu_custom_call.1} parent=5 // pred_fallthru
        _
      %p647 = scmp.le.s32.totalorder 2, %s14
      // Predicated region
      $region45: #{tpu_custom_call.1} parent=5 // pred_check
        %p648 = pneg %p647
      $region46: #{tpu_custom_call.1} parent=5 // pred_check_branch
        %650 = sbr.rel (%p648) target = $region48
      $region47: #{tpu_custom_call.1} parent=5 // pred_region
        %s651 = ssub.s32 %s14, 2
        // Predicated region
        $region49: #{tpu_custom_call.1} parent=47 // pred_check
          %p652 = pneg %p176
        $region50: #{tpu_custom_call.1} parent=47 // pred_check_branch
          %654 = sbr.rel (%p652) target = $region52
        $region51: #{tpu_custom_call.1} parent=47 // pred_region
          %s655 = sand.u32 %s161, 1
          %s656 = scalar_lea.sflag [#allocation3], %s655
          %s657 = sand.u32 %s161, 1
          %s658 = smul.addr %s657, 64
          %s659 = scalar_lea.vmem [#allocation2], %s658
          %660 = dma.done %s656, 1024
        $region52: #{tpu_custom_call.1} parent=47 // pred_fallthru
          _
      $region48: #{tpu_custom_call.1} parent=5 // pred_fallthru
        _
    $region6: #{tpu_custom_call.1} parent=1 // loop_footer
      %s18 = sadd.s32 1, %s14
    $region7: #{tpu_custom_call.1} parent=1 // loop_footer_branch
      %13 = sbr.rel target = $region3
    $region8: #{tpu_custom_call.1} parent=1 // loop_exit
      _
    %661 = vsyncpa [#allocation3], 1
    %s662 = scalar_lea.sflag [#allocation3], 1
    %663 = vsyncpa %s662, 1

</llo_original>
